<compile_context>
chip_gen: v5e
topology: v5e:2x2
jax: 0.10.0
libtpu: 0.0.40
codegen_flags: <defaults>
</compile_context>

<pallas_src>
import jax
import jax.numpy as jnp
from jax.experimental import pallas as pl
from jax.experimental.pallas import tpu as pltpu

LANE = 128
SUBLANE = 8


def _round_up(x, m):
    return (x + m - 1) // m * m


def _divisor_at_most(n, cap):
    d = min(n, cap)
    while n % d != 0:
        d -= 1
    return d


def _pick_row_block(n):
    if n <= 256:
        return _round_up(n, SUBLANE)
    return 256


def _compiler_params(sem, est_bytes):
    # Explicit scoped-VMEM budget from actual buffer sizes (+2x headroom), clamped so the
    # request stays inside v7x's 64 MiB physical VMEM per TensorCore.
    limit = int(min(60 * 2**20, max(32 * 2**20, 2 * est_bytes)))
    return pltpu.CompilerParams(dimension_semantics=sem, vmem_limit_bytes=limit)


def _resident_spec(block_shape, index_map):
    """Constant-index operand: keep a single resident copy (no double-buffering)."""
    return pl.BlockSpec(block_shape, index_map, pipeline_mode=pl.Buffered(1))


# ----------------------------------------------------------------------------
# Batched matmul + bias: G = X @ W + b, row-tiled, weight resident (single buffer).
# Used for the hoisted input-to-hidden projection of each LSTM layer.
# ----------------------------------------------------------------------------
def _matmul_bias_kernel(x_ref, w_ref, b_ref, out_ref):
    acc = jnp.dot(x_ref[...].astype(w_ref.dtype), w_ref[...],
                  preferred_element_type=jnp.float32)
    out_ref[...] = (acc + b_ref[...].astype(jnp.float32)).astype(out_ref.dtype)


def matmul_bias(x, w, b, out_dtype=jnp.float32):
    """x: (N, K), w: (K, M), b: (1, M) -> (N, M) in out_dtype."""
    N, K = x.shape
    M = w.shape[1]
    nb = _pick_row_block(N)
    n_pad = _round_up(N, nb)
    if n_pad != N:
        x = jnp.zeros((n_pad, K), x.dtype).at[:N].set(x)
    est = (2 * nb * K * x.dtype.itemsize
           + w.size * w.dtype.itemsize + b.size * b.dtype.itemsize
           + 2 * nb * M * jnp.dtype(out_dtype).itemsize)
    out = pl.pallas_call(
        _matmul_bias_kernel,
        out_shape=jax.ShapeDtypeStruct((n_pad, M), out_dtype),
        grid_spec=pltpu.PrefetchScalarGridSpec(
            num_scalar_prefetch=0,
            grid=(n_pad // nb,),
            in_specs=[
                pl.BlockSpec((nb, K), lambda i: (i, 0)),
                _resident_spec((K, M), lambda i: (0, 0)),
                _resident_spec((1, M), lambda i: (0, 0)),
            ],
            out_specs=pl.BlockSpec((nb, M), lambda i: (i, 0)),
        ),
        compiler_params=_compiler_params(("parallel",), est),
    )(x, w, b)
    return out[:N]


# ----------------------------------------------------------------------------
# Recurrent LSTM kernel: grid iterates over time-blocks of TT steps; only the
# hidden-to-hidden matmul is inside the serial loop.  h/c carry lives in VMEM
# scratch.  Gate order matches PyTorch: i, f, g, o.
# ----------------------------------------------------------------------------
def _lstm_rec_kernel(h0_ref, c0_ref, g_ref, whh_ref, y_ref, hT_ref, cT_ref, h_sc, c_sc):
    tb = pl.program_id(0)
    TT = g_ref.shape[0]
    H = h_sc.shape[-1]

    @pl.when(tb == 0)
    def _():
        h_sc[...] = h0_ref[...].astype(jnp.float32)
        c_sc[...] = c0_ref[...].astype(jnp.float32)

    def step(s, carry):
        gates = g_ref[s].astype(jnp.float32) + jnp.dot(
            h_sc[...].astype(whh_ref.dtype), whh_ref[...],
            preferred_element_type=jnp.float32)                  # (B, 4H)
        i = jax.nn.sigmoid(gates[:, 0 * H:1 * H])
        f = jax.nn.sigmoid(gates[:, 1 * H:2 * H])
        g = jnp.tanh(gates[:, 2 * H:3 * H])
        o = jax.nn.sigmoid(gates[:, 3 * H:4 * H])
        c = f * c_sc[...] + i * g
        h = o * jnp.tanh(c)
        h_sc[...] = h
        c_sc[...] = c
        y_ref[s] = h.astype(y_ref.dtype)
        return carry

    jax.lax.fori_loop(0, TT, step, 0, unroll=True)

    @pl.when(tb == pl.num_programs(0) - 1)
    def _():
        hT_ref[...] = h_sc[...].astype(hT_ref.dtype)
        cT_ref[...] = c_sc[...].astype(cT_ref.dtype)


def lstm_layer(gates, h0, c0, whh_t, out_dtype):
    """gates: (T, B, 4H) f32 (precomputed X@W_ih^T+b); h0/c0: (B, H) f32; whh_t: (H, 4H)."""
    T, B, H4 = gates.shape
    H = h0.shape[-1]
    tt = _divisor_at_most(T, 16)
    est = (2 * tt * B * H4 * 4 + whh_t.size * whh_t.dtype.itemsize
           + 4 * B * H * 4 + 2 * tt * B * H * jnp.dtype(out_dtype).itemsize
           + 2 * B * H * 4)
    return pl.pallas_call(
        _lstm_rec_kernel,
        out_shape=(jax.ShapeDtypeStruct((T, B, H), out_dtype),
                   jax.ShapeDtypeStruct((B, H), jnp.float32),
                   jax.ShapeDtypeStruct((B, H), jnp.float32)),
        grid_spec=pltpu.PrefetchScalarGridSpec(
            num_scalar_prefetch=0,
            grid=(T // tt,),
            in_specs=[
                _resident_spec((B, H), lambda t: (0, 0)),        # h0
                _resident_spec((B, H), lambda t: (0, 0)),        # c0
                pl.BlockSpec((tt, B, H4), lambda t: (t, 0, 0)),  # precomputed ih gates
                _resident_spec((H, H4), lambda t: (0, 0)),       # W_hh^T (single copy)
            ],
            out_specs=[
                pl.BlockSpec((tt, B, H), lambda t: (t, 0, 0)),   # per-step outputs
                pl.BlockSpec((B, H), lambda t: (0, 0)),          # final h (written once)
                pl.BlockSpec((B, H), lambda t: (0, 0)),          # final c (written once)
            ],
            scratch_shapes=[pltpu.VMEM((B, H), jnp.float32),
                            pltpu.VMEM((B, H), jnp.float32)],
        ),
        compiler_params=_compiler_params(("arbitrary",), est),
    )(h0, c0, gates, whh_t)


# ----------------------------------------------------------------------------
# Decoder: logits = x @ W^T + b, then log_softmax over the (padded) vocab axis.
# Row-tiled; W_dec^T stays resident (single buffer).  Padded vocab columns carry
# bias = -1e30 so they vanish from the softmax.
# ----------------------------------------------------------------------------
def _decoder_kernel(x_ref, w_ref, b_ref, out_ref):
    logits = (jnp.dot(x_ref[...].astype(w_ref.dtype), w_ref[...],
                      preferred_element_type=jnp.float32)
              + b_ref[...].astype(jnp.float32))                  # (NB, V_pad)
    m = jnp.max(logits, axis=-1, keepdims=True)
    shifted = logits - m
    lse = jnp.log(jnp.sum(jnp.exp(shifted), axis=-1, keepdims=True))
    out_ref[...] = (shifted - lse).astype(out_ref.dtype)


def decoder(x, w_dec_t, b_dec):
    # TODO(synk): vocab-axis tiling with online log-softmax not implemented (V_pad kept resident).
    N, K = x.shape
    V = w_dec_t.shape[1]
    nb = _pick_row_block(N)
    n_pad = _round_up(N, nb)
    if n_pad != N:
        x = jnp.zeros((n_pad, K), x.dtype).at[:N].set(x)
    est = (2 * nb * K * x.dtype.itemsize + w_dec_t.size * w_dec_t.dtype.itemsize
           + b_dec.size * 4 + 2 * nb * V * 4 + nb * V * 4)
    out = pl.pallas_call(
        _decoder_kernel,
        out_shape=jax.ShapeDtypeStruct((n_pad, V), jnp.float32),
        grid_spec=pltpu.PrefetchScalarGridSpec(
            num_scalar_prefetch=0,
            grid=(n_pad // nb,),
            in_specs=[
                pl.BlockSpec((nb, K), lambda i: (i, 0)),
                _resident_spec((K, V), lambda i: (0, 0)),
                _resident_spec((1, V), lambda i: (0, 0)),
            ],
            out_specs=pl.BlockSpec((nb, V), lambda i: (i, 0)),
        ),
        compiler_params=_compiler_params(("parallel",), est),
    )(x, w_dec_t, b_dec)
    return out[:N]


# ----------------------------------------------------------------------------
# Parameter padding/casting: H and vocab padded to multiples of 128 (lane axis),
# gate blocks padded per-gate so slice offsets are lane aligned.  Zero padding is
# exact for the LSTM recurrence (padded gates keep c=h=0).
# ----------------------------------------------------------------------------
def pad_params(params, compute_dtype=jnp.float32):
    nhid, ntoken = params["w_dec_t"].shape
    H_pad = _round_up(nhid, LANE)
    V_pad = _round_up(ntoken, LANE)
    nlayers = len(params["wih_t"])

    def pad_gate_cols(w):
        in_dim = w.shape[0]
        w4 = w.reshape(in_dim, 4, nhid)
        out = jnp.zeros((in_dim, 4, H_pad), w.dtype).at[:, :, :nhid].set(w4)
        return out.reshape(in_dim, 4 * H_pad)

    def pad_rows(w, rows):
        return jnp.zeros((rows, w.shape[1]), w.dtype).at[:w.shape[0]].set(w)

    p = {"nhid": nhid, "ntoken": ntoken, "H_pad": H_pad, "V_pad": V_pad,
         "nlayers": nlayers,
         "emb": params["emb"].astype(compute_dtype),
         "wih_t": [], "whh_t": [], "b": []}

    for l in range(nlayers):
        wih = pad_gate_cols(params["wih_t"][l])
        if l > 0:
            wih = pad_rows(wih, H_pad)          # previous layer's output is H_pad wide
        p["wih_t"].append(wih.astype(compute_dtype))
        p["whh_t"].append(pad_rows(pad_gate_cols(params["whh_t"][l]), H_pad)
                          .astype(compute_dtype))
        b = jnp.zeros((1, 4, H_pad), jnp.float32).at[:, :, :nhid].set(
            params["b"][l].reshape(1, 4, nhid).astype(jnp.float32))
        p["b"].append(b.reshape(1, 4 * H_pad))  # bias stays f32 (added post-accumulation)

    w_dec = pad_rows(params["w_dec_t"], H_pad)
    if V_pad != ntoken:
        w_dec = jnp.concatenate(
            [w_dec, jnp.zeros((H_pad, V_pad - ntoken), w_dec.dtype)], axis=1)
    p["w_dec_t"] = w_dec.astype(compute_dtype)
    p["b_dec"] = jnp.full((1, V_pad), -1e30, jnp.float32).at[:, :ntoken].set(
        params["b_dec"].astype(jnp.float32))
    return p


# ----------------------------------------------------------------------------
# Full model forward (embedding gather + padding/reshapes are plain-JAX glue).
# ----------------------------------------------------------------------------
def rnn_model_forward(padded, tokens, hidden):
    """tokens: (T, B) int32; hidden: (h0, c0) each (nlayers, B, nhid)."""
    h0, c0 = hidden
    nlayers, B, nhid = h0.shape
    T = tokens.shape[0]
    H_pad, V_pad, ntoken = padded["H_pad"], padded["V_pad"], padded["ntoken"]
    B_pad = _round_up(max(B, SUBLANE), SUBLANE)
    compute_dtype = padded["emb"].dtype

    emb = jnp.take(padded["emb"], tokens, axis=0)                 # (T, B, ninp)
    # TODO(synk): dropout is identity (eval mode); training-mode PRNG dropout not implemented.
    if B_pad != B:
        emb = jnp.concatenate(
            [emb, jnp.zeros((T, B_pad - B, emb.shape[-1]), emb.dtype)], axis=1)

    def pad_state(s):                                             # (B, nhid)->(B_pad, H_pad)
        return jnp.zeros((B_pad, H_pad), jnp.float32).at[:B, :nhid].set(
            s.astype(jnp.float32))

    x = emb                                                       # (T, B_pad, in_dim)
    h_list, c_list = [], []
    for l in range(nlayers):
        in_dim = x.shape[-1]
        # Hoisted input-to-hidden projection over the whole sequence (one big matmul).
        g = matmul_bias(x.reshape(T * B_pad, in_dim),
                        padded["wih_t"][l], padded["b"][l],
                        out_dtype=jnp.float32).reshape(T, B_pad, 4 * H_pad)
        y, hT, cT = lstm_layer(g, pad_state(h0[l]), pad_state(c0[l]),
                               padded["whh_t"][l], out_dtype=compute_dtype)
        h_list.append(hT[:B, :nhid])
        c_list.append(cT[:B, :nhid])
        x = y                                                     # (T, B_pad, H_pad)

    lp = decoder(x.reshape(T * B_pad, H_pad), padded["w_dec_t"], padded["b_dec"])
    lp = lp.reshape(T, B_pad, V_pad)[:, :B, :ntoken].reshape(T * B, ntoken)
    return lp, (jnp.stack(h_list), jnp.stack(c_list))


# ----------------------------------------------------------------------------
# Pure-JAX f32 reference (correctness check only).
# ----------------------------------------------------------------------------
def reference_forward(params, tokens, hidden):
    h0, c0 = hidden
    x = jnp.take(params["emb"], tokens, axis=0)
    nhid = h0.shape[-1]
    h_list, c_list = [], []
    for l in range(len(params["wih_t"])):
        def step(carry, x_t, l=l):
            h, c = carry
            gates = x_t @ params["wih_t"][l] + h @ params["whh_t"][l] + params["b"][l]
            i = jax.nn.sigmoid(gates[:, 0 * nhid:1 * nhid])
            f = jax.nn.sigmoid(gates[:, 1 * nhid:2 * nhid])
            g = jnp.tanh(gates[:, 2 * nhid:3 * nhid])
            o = jax.nn.sigmoid(gates[:, 3 * nhid:4 * nhid])
            c = f * c + i * g
            h = o * jnp.tanh(c)
            return (h, c), h
        (hT, cT), ys = jax.lax.scan(step, (h0[l], c0[l]), x)
        x = ys
        h_list.append(hT)
        c_list.append(cT)
    T, B, H = x.shape
    logits = x.reshape(T * B, H) @ params["w_dec_t"] + params["b_dec"]
    return jax.nn.log_softmax(logits, axis=-1), (jnp.stack(h_list), jnp.stack(c_list))


def init_params(key, ntoken, ninp, nhid, nlayers):
    ks = jax.random.split(key, 3 + 4 * nlayers)
    initrange = 0.1
    params = {
        "emb": jax.random.uniform(ks[0], (ntoken, ninp), jnp.float32, -initrange, initrange),
        "w_dec_t": jax.random.uniform(ks[1], (nhid, ntoken), jnp.float32, -initrange, initrange),
        "b_dec": jnp.zeros((1, ntoken), jnp.float32),
        "wih_t": [], "whh_t": [], "b": [],
    }
    stdv = 1.0 / (nhid ** 0.5)
    for l in range(nlayers):
        in_dim = ninp if l == 0 else nhid
        k = ks[3 + 4 * l: 3 + 4 * (l + 1)]
        params["wih_t"].append(
            jax.random.uniform(k[0], (in_dim, 4 * nhid), jnp.float32, -stdv, stdv))
        params["whh_t"].append(
            jax.random.uniform(k[1], (nhid, 4 * nhid), jnp.float32, -stdv, stdv))
        b_ih = jax.random.uniform(k[2], (4 * nhid,), jnp.float32, -stdv, stdv)
        b_hh = jax.random.uniform(k[3], (4 * nhid,), jnp.float32, -stdv, stdv)
        params["b"].append((b_ih + b_hh)[None, :])
    return params


if __name__ == "__main__":
    ntoken, ninp, nhid, nlayers = 64, 32, 32, 2
    T, B = 8, 2

    key = jax.random.PRNGKey(0)
    kp, kt = jax.random.split(key)
    params = init_params(kp, ntoken, ninp, nhid, nlayers)

    tokens = jax.random.randint(kt, (T, B), 0, ntoken, dtype=jnp.int32)
    hidden = (jnp.zeros((nlayers, B, nhid), jnp.float32),
              jnp.zeros((nlayers, B, nhid), jnp.float32))

    ref_lp, (ref_h, ref_c) = reference_forward(params, tokens, hidden)

    # f32 compute path: tight check against the pure-JAX reference.
    padded_f32 = pad_params(params, compute_dtype=jnp.float32)
    log_probs, (hN, cN) = rnn_model_forward(padded_f32, tokens, hidden)
    jax.block_until_ready((log_probs, hN, cN))
    assert log_probs.shape == (T * B, ntoken)
    assert jnp.allclose(log_probs, ref_lp, atol=5e-5, rtol=5e-5)
    assert jnp.allclose(hN, ref_h, atol=5e-5, rtol=5e-5)
    assert jnp.allclose(cN, ref_c, atol=5e-5, rtol=5e-5)

    # bf16 matmul inputs (f32 accumulation + f32 h/c carry): loose sanity check.
    padded_bf16 = pad_params(params, compute_dtype=jnp.bfloat16)
    lp16, (h16, c16) = rnn_model_forward(padded_bf16, tokens, hidden)
    jax.block_until_ready((lp16, h16, c16))
    assert lp16.shape == (T * B, ntoken)
    assert bool(jnp.all(jnp.isfinite(lp16)))
    assert jnp.allclose(lp16, ref_lp, atol=0.3, rtol=0.1)

    print("KERNEL_OK")
</pallas_src>

<mosaic_0001>
module attributes {stable_mosaic.version = 11 : i64} {
  func.func @_matmul_bias_kernel(%arg0: i32, %arg1: memref<64x32xf32, #tpu.memory_space<vmem>>, %arg2: memref<32x512xf32, #tpu.memory_space<vmem>>, %arg3: memref<1x512xf32, #tpu.memory_space<vmem>>, %arg4: memref<64x512xf32, #tpu.memory_space<vmem>>) attributes {dimension_semantics = [#tpu.dimension_semantics<parallel>], iteration_bounds = array<i64: 1>, scalar_prefetch = 0 : i64, scratch_operands = 0 : i64, tpu.core_type = #tpu.core_type<tc>, window_params = [{transform_indices = @transform_0, window_bounds = array<i64: 64, 32>}, {pipeline_mode = #tpu.pipeline_mode<synchronous>, transform_indices = @transform_1, window_bounds = array<i64: 32, 512>}, {pipeline_mode = #tpu.pipeline_mode<synchronous>, transform_indices = @transform_2, window_bounds = array<i64: 1, 512>}, {transform_indices = @transform_3, window_bounds = array<i64: 64, 512>}]} {
    %c0 = arith.constant 0 : index
    %c0_0 = arith.constant 0 : index
    %0 = vector.load %arg1[%c0, %c0_0] : memref<64x32xf32, #tpu.memory_space<vmem>>, vector<64x32xf32>
    %c0_1 = arith.constant 0 : index
    %c0_2 = arith.constant 0 : index
    %1 = vector.load %arg2[%c0_1, %c0_2] : memref<32x512xf32, #tpu.memory_space<vmem>>, vector<32x512xf32>
    %cst = arith.constant dense<0.000000e+00> : vector<64x512xf32>
    %2 = tpu.matmul %0, %1, %cst {dimension_numbers = #tpu.dot_dimension_numbers<[1], [0], [0], [1], [0, 0, 1, 1], [], []>} : vector<64x32xf32>, vector<32x512xf32>, vector<64x512xf32> -> vector<64x512xf32>
    %c0_3 = arith.constant 0 : index
    %c0_4 = arith.constant 0 : index
    %3 = vector.load %arg3[%c0_3, %c0_4] : memref<1x512xf32, #tpu.memory_space<vmem>>, vector<1x512xf32>
    %4 = vector.broadcast %3 : vector<1x512xf32> to vector<64x512xf32>
    %5 = arith.addf %2, %4 : vector<64x512xf32>
    %c0_5 = arith.constant 0 : index
    %c0_6 = arith.constant 0 : index
    %6 = vector.load %arg4[%c0_5, %c0_6] : memref<64x512xf32, #tpu.memory_space<vmem>>, vector<64x512xf32>
    tpu.vector_store %arg4[%c0_5, %c0_6], %5 {strides = array<i32>} : memref<64x512xf32, #tpu.memory_space<vmem>>, vector<64x512xf32>,
    return
  }
  func.func @transform_0(%arg0: i32) -> (i32, i32) {
    %c0_i32 = arith.constant 0 : i32
    %c0_i32_0 = arith.constant 0 : i32
    return %arg0, %c0_i32 : i32, i32
  }
  func.func @transform_1(%arg0: i32) -> (i32, i32) {
    %c0_i32 = arith.constant 0 : i32
    %c0_i32_0 = arith.constant 0 : i32
    %c0_i32_1 = arith.constant 0 : i32
    return %c0_i32, %c0_i32_0 : i32, i32
  }
  func.func @transform_2(%arg0: i32) -> (i32, i32) {
    %c0_i32 = arith.constant 0 : i32
    %c0_i32_0 = arith.constant 0 : i32
    %c0_i32_1 = arith.constant 0 : i32
    return %c0_i32, %c0_i32_0 : i32, i32
  }
  func.func @transform_3(%arg0: i32) -> (i32, i32) {
    %c0_i32 = arith.constant 0 : i32
    %c0_i32_0 = arith.constant 0 : i32
    return %arg0, %c0_i32 : i32, i32
  }
}

</mosaic_0001>

<llo_original>
// kernel: tpu_custom_call.1
$region0: #{tpu_custom_call.1}
  #allocation0 [shape = 'u32[]', space=smem, size = 0x4, offset = 0x4, fixed_abs, tag = 'smem constant byte address 0x4 - core index']
  #allocation1 [shape = 'u32[72,128]{1,0:T(1,128)}', space=vmem, size = 0x9000, scoped, tag = 'internal scratch']
  %s0 = inlined_call_operand.vmem [shape: f32[64,32], index: 0, kind: input, shape index: {}]
  %s1 = inlined_call_operand.hbm [shape: f32[32,512], index: 1, kind: input, shape index: {}]
  %s2 = inlined_call_operand.vmem [shape: f32[1,512], index: 2, kind: input, shape index: {}]
  %s3 = inlined_call_operand.hbm [shape: f32[64,512], index: 3, kind: output, shape index: {}]
  %s4 = sld [smem:[#allocation0]]
  $region26: #{tpu_custom_call.1} parent=0
    _
  %s6 = ssub.s32 1, %s4
  %s7 = scalar_select 0, %s6, %s4
  $region1: #{tpu_custom_call.1} parent=0
    #allocation2 [shape = 'u8[65536]{0}', space=vmem, size = 0x10000, scoped, tag = 'input window, operand 1, single buffered']
    #allocation3 [shape = 's32[1]{0}', space=sflag, size = 0x4, scoped, tag = 'scoped memory for tpu_custom_call.1']
    #allocation4 [shape = 's32[1]{0}', space=sflag, size = 0x4, scoped, tag = 'scoped memory for tpu_custom_call.1']
    #allocation5 [shape = 'u8[131072]{0}', space=vmem, size = 0x20000, scoped, tag = 'output window, operand 0, single buffered']
    %8 = vsyncpa [#allocation3], 0
    %9 = vsyncpa [#allocation4], 0
    // Predicated region
    $region2: #{tpu_custom_call.1} parent=1 // pred_check
      _
    $region3: #{tpu_custom_call.1} parent=1 // pred_check_branch
      %11 = sbr.rel (0) target = $region5
    $region4: #{tpu_custom_call.1} parent=1 // pred_region
      _
    $region5: #{tpu_custom_call.1} parent=1 // pred_fallthru
      _
    // Predicated region
    $region6: #{tpu_custom_call.1} parent=1 // pred_check
      _
    $region7: #{tpu_custom_call.1} parent=1 // pred_check_branch
      %13 = sbr.rel (0) target = $region9
    $region8: #{tpu_custom_call.1} parent=1 // pred_region
      %15 = vsyncadd [#allocation3], 0
      %s16 = sshll.u32 %s1, 4
      %s17 = int_to_ptr.hbm [resolvable:$true] %s16
      %s18 = sshll.u32 [#allocation2], 4
      %s19 = int_to_ptr.vmem [resolvable:$true] %s18
      %24 = dma.hbm_to_vmem [thread:$0]  %s17, 2048, %s19, [#allocation3], 512, 512, 32
    $region9: #{tpu_custom_call.1} parent=1 // pred_fallthru
      _
    // Predicated region
    $region10: #{tpu_custom_call.1} parent=1 // pred_check
      _
    $region11: #{tpu_custom_call.1} parent=1 // pred_check_branch
      %26 = sbr.rel (0) target = $region13
    $region12: #{tpu_custom_call.1} parent=1 // pred_region
      _
    $region13: #{tpu_custom_call.1} parent=1 // pred_fallthru
      _
    // Predicated region
    $region14: #{tpu_custom_call.1} parent=1 // pred_check
      _
    $region15: #{tpu_custom_call.1} parent=1 // pred_check_branch
      %28 = sbr.rel (0) target = $region17
    $region16: #{tpu_custom_call.1} parent=1 // pred_region
      %30 = dma.done [#allocation3], 2048
    $region17: #{tpu_custom_call.1} parent=1 // pred_fallthru
      _
    %v31 = vld [vmem:[%s0] sm:$0xff]
    %v32 = vld [vmem:[%s0 + $0x8] sm:$0xff]
    %v33 = vld [vmem:[%s0 + $0x10] sm:$0xff]
    %v34 = vld [vmem:[%s0 + $0x18] sm:$0xff]
    %v35 = vld [vmem:[%s0 + $0x20] sm:$0xff]
    %v36 = vld [vmem:[%s0 + $0x28] sm:$0xff]
    %v37 = vld [vmem:[%s0 + $0x30] sm:$0xff]
    %v38 = vld [vmem:[%s0 + $0x38] sm:$0xff]
    %v39 = vld [vmem:[#allocation2] sm:$0xff]
    %v40 = vld [vmem:[#allocation2 + $0x8] sm:$0xff]
    %v41 = vld [vmem:[#allocation2 + $0x10] sm:$0xff]
    %v42 = vld [vmem:[#allocation2 + $0x18] sm:$0xff]
    %v43 = vld [vmem:[#allocation2 + $0x20] sm:$0xff]
    %v44 = vld [vmem:[#allocation2 + $0x28] sm:$0xff]
    %v45 = vld [vmem:[#allocation2 + $0x30] sm:$0xff]
    %v46 = vld [vmem:[#allocation2 + $0x38] sm:$0xff]
    %v47 = vld [vmem:[#allocation2 + $0x40] sm:$0xff]
    %v48 = vld [vmem:[#allocation2 + $0x48] sm:$0xff]
    %v49 = vld [vmem:[#allocation2 + $0x50] sm:$0xff]
    %v50 = vld [vmem:[#allocation2 + $0x58] sm:$0xff]
    %v51 = vld [vmem:[#allocation2 + $0x60] sm:$0xff]
    %v52 = vld [vmem:[#allocation2 + $0x68] sm:$0xff]
    %v53 = vld [vmem:[#allocation2 + $0x70] sm:$0xff]
    %v54 = vld [vmem:[#allocation2 + $0x78] sm:$0xff]
    %v55 = vld [vmem:[%s2] sm:$0xf]
    %v57 = vperm.slane %v55, 0
    %v58 = vperm.slane %v55, 1
    %v59 = vperm.slane %v55, 2
    %v60 = vperm.slane %v55, 3
    %vm65 = vcmask 261120
    %v67 = vsel %vm65, %v31, 0
    %v70 = vsel %vm65, %v32, 0
    %v73 = vsel %vm65, %v33, 0
    %v76 = vsel %vm65, %v34, 0
    %v79 = vsel %vm65, %v35, 0
    %v82 = vsel %vm65, %v36, 0
    %v85 = vsel %vm65, %v37, 0
    %v88 = vsel %vm65, %v38, 0
    %90 = vmatpush.msra.mxu0 0.0
    %91 = vmatpush.msra.mxu0 0.0
    %92 = vmatpush.msra.mxu0 0.0
    %93 = vmatpush.msra.mxu0 0.0
    %94 = vmatpush.msra.mxu0 0.0
    %95 = vmatpush.msra.mxu0 0.0
    %96 = vmatpush.msra.mxu0 0.0
    %97 = vmatpush.msra.mxu0 0.0
    %98 = vmatpush.msra.mxu0 0.0
    %99 = vmatpush.msra.mxu0 0.0
    %100 = vmatpush.msra.mxu0 0.0
    %101 = vmatpush.msra.mxu0 0.0
    %102 = vmatpush.msra.mxu0 %v51
    %103 = vmatpush.msra.mxu0 %v47
    %104 = vmatpush.msra.mxu0 %v43
    %105 = vmatpush.msra.mxu0 %v39
    %106 = vmatmul.f32.gmra.mxu0 %v67
    %v107 = vpop.f32.mrf.mxu0
    %v108 = vadd.f32 %v57, %v107
    %109 = vmatmul.f32.gmra.mxu0 %v70
    %v110 = vpop.f32.mrf.mxu0
    %v111 = vadd.f32 %v57, %v110
    %112 = vmatmul.f32.gmra.mxu0 %v73
    %v113 = vpop.f32.mrf.mxu0
    %v114 = vadd.f32 %v57, %v113
    %115 = vmatmul.f32.gmra.mxu0 %v76
    %v116 = vpop.f32.mrf.mxu0
    %v117 = vadd.f32 %v57, %v116
    %118 = vmatmul.f32.gmra.mxu0 %v79
    %v119 = vpop.f32.mrf.mxu0
    %v120 = vadd.f32 %v57, %v119
    %121 = vmatmul.f32.gmra.mxu0 %v82
    %v122 = vpop.f32.mrf.mxu0
    %v123 = vadd.f32 %v57, %v122
    %124 = vmatmul.f32.gmra.mxu0 %v85
    %v125 = vpop.f32.mrf.mxu0
    %v126 = vadd.f32 %v57, %v125
    %127 = vmatmul.f32.gmra.mxu0 %v88
    %v128 = vpop.f32.mrf.mxu0
    %v129 = vadd.f32 %v57, %v128
    %130 = vdwg.mxu0
    %131 = vmatpush.msra.mxu0 0.0
    %132 = vmatpush.msra.mxu0 0.0
    %133 = vmatpush.msra.mxu0 0.0
    %134 = vmatpush.msra.mxu0 0.0
    %135 = vmatpush.msra.mxu0 0.0
    %136 = vmatpush.msra.mxu0 0.0
    %137 = vmatpush.msra.mxu0 0.0
    %138 = vmatpush.msra.mxu0 0.0
    %139 = vmatpush.msra.mxu0 0.0
    %140 = vmatpush.msra.mxu0 0.0
    %141 = vmatpush.msra.mxu0 0.0
    %142 = vmatpush.msra.mxu0 0.0
    %143 = vmatpush.msra.mxu0 %v52
    %144 = vmatpush.msra.mxu0 %v48
    %145 = vmatpush.msra.mxu0 %v44
    %146 = vmatpush.msra.mxu0 %v40
    %147 = vmatmul.f32.gmra.mxu0 %v67
    %v148 = vpop.f32.mrf.mxu0
    %v149 = vadd.f32 %v58, %v148
    %150 = vmatmul.f32.gmra.mxu0 %v70
    %v151 = vpop.f32.mrf.mxu0
    %v152 = vadd.f32 %v58, %v151
    %153 = vmatmul.f32.gmra.mxu0 %v73
    %v154 = vpop.f32.mrf.mxu0
    %v155 = vadd.f32 %v58, %v154
    %156 = vmatmul.f32.gmra.mxu0 %v76
    %v157 = vpop.f32.mrf.mxu0
    %v158 = vadd.f32 %v58, %v157
    %159 = vmatmul.f32.gmra.mxu0 %v79
    %v160 = vpop.f32.mrf.mxu0
    %v161 = vadd.f32 %v58, %v160
    %162 = vmatmul.f32.gmra.mxu0 %v82
    %v163 = vpop.f32.mrf.mxu0
    %v164 = vadd.f32 %v58, %v163
    %165 = vmatmul.f32.gmra.mxu0 %v85
    %v166 = vpop.f32.mrf.mxu0
    %v167 = vadd.f32 %v58, %v166
    %168 = vmatmul.f32.gmra.mxu0 %v88
    %v169 = vpop.f32.mrf.mxu0
    %v170 = vadd.f32 %v58, %v169
    %171 = vdwg.mxu0
    %172 = vmatpush.msra.mxu0 0.0
    %173 = vmatpush.msra.mxu0 0.0
    %174 = vmatpush.msra.mxu0 0.0
    %175 = vmatpush.msra.mxu0 0.0
    %176 = vmatpush.msra.mxu0 0.0
    %177 = vmatpush.msra.mxu0 0.0
    %178 = vmatpush.msra.mxu0 0.0
    %179 = vmatpush.msra.mxu0 0.0
    %180 = vmatpush.msra.mxu0 0.0
    %181 = vmatpush.msra.mxu0 0.0
    %182 = vmatpush.msra.mxu0 0.0
    %183 = vmatpush.msra.mxu0 0.0
    %184 = vmatpush.msra.mxu0 %v53
    %185 = vmatpush.msra.mxu0 %v49
    %186 = vmatpush.msra.mxu0 %v45
    %187 = vmatpush.msra.mxu0 %v41
    %188 = vmatmul.f32.gmra.mxu0 %v67
    %v189 = vpop.f32.mrf.mxu0
    %v190 = vadd.f32 %v59, %v189
    %191 = vmatmul.f32.gmra.mxu0 %v70
    %v192 = vpop.f32.mrf.mxu0
    %v193 = vadd.f32 %v59, %v192
    %194 = vmatmul.f32.gmra.mxu0 %v73
    %v195 = vpop.f32.mrf.mxu0
    %v196 = vadd.f32 %v59, %v195
    %197 = vmatmul.f32.gmra.mxu0 %v76
    %v198 = vpop.f32.mrf.mxu0
    %v199 = vadd.f32 %v59, %v198
    %200 = vmatmul.f32.gmra.mxu0 %v79
    %v201 = vpop.f32.mrf.mxu0
    %v202 = vadd.f32 %v59, %v201
    %203 = vmatmul.f32.gmra.mxu0 %v82
    %v204 = vpop.f32.mrf.mxu0
    %v205 = vadd.f32 %v59, %v204
    %206 = vmatmul.f32.gmra.mxu0 %v85
    %v207 = vpop.f32.mrf.mxu0
    %v208 = vadd.f32 %v59, %v207
    %209 = vmatmul.f32.gmra.mxu0 %v88
    %v210 = vpop.f32.mrf.mxu0
    %v211 = vadd.f32 %v59, %v210
    %212 = vdwg.mxu0
    %213 = vmatpush.msra.mxu0 0.0
    %214 = vmatpush.msra.mxu0 0.0
    %215 = vmatpush.msra.mxu0 0.0
    %216 = vmatpush.msra.mxu0 0.0
    %217 = vmatpush.msra.mxu0 0.0
    %218 = vmatpush.msra.mxu0 0.0
    %219 = vmatpush.msra.mxu0 0.0
    %220 = vmatpush.msra.mxu0 0.0
    %221 = vmatpush.msra.mxu0 0.0
    %222 = vmatpush.msra.mxu0 0.0
    %223 = vmatpush.msra.mxu0 0.0
    %224 = vmatpush.msra.mxu0 0.0
    %225 = vmatpush.msra.mxu0 %v54
    %226 = vmatpush.msra.mxu0 %v50
    %227 = vmatpush.msra.mxu0 %v46
    %228 = vmatpush.msra.mxu0 %v42
    %229 = vmatmul.f32.gmra.mxu0 %v67
    %v230 = vpop.f32.mrf.mxu0
    %v231 = vadd.f32 %v60, %v230
    %232 = vmatmul.f32.gmra.mxu0 %v70
    %v233 = vpop.f32.mrf.mxu0
    %v234 = vadd.f32 %v60, %v233
    %235 = vmatmul.f32.gmra.mxu0 %v73
    %v236 = vpop.f32.mrf.mxu0
    %v237 = vadd.f32 %v60, %v236
    %238 = vmatmul.f32.gmra.mxu0 %v76
    %v239 = vpop.f32.mrf.mxu0
    %v240 = vadd.f32 %v60, %v239
    %241 = vmatmul.f32.gmra.mxu0 %v79
    %v242 = vpop.f32.mrf.mxu0
    %v243 = vadd.f32 %v60, %v242
    %244 = vmatmul.f32.gmra.mxu0 %v82
    %v245 = vpop.f32.mrf.mxu0
    %v246 = vadd.f32 %v60, %v245
    %247 = vmatmul.f32.gmra.mxu0 %v85
    %v248 = vpop.f32.mrf.mxu0
    %v249 = vadd.f32 %v60, %v248
    %250 = vmatmul.f32.gmra.mxu0 %v88
    %v251 = vpop.f32.mrf.mxu0
    %v252 = vadd.f32 %v60, %v251
    %253 = vdwg.mxu0
    %254 = vst [vmem:[#allocation5] sm:$0xff] %v108
    %255 = vst [vmem:[#allocation5 + $0x8] sm:$0xff] %v149
    %256 = vst [vmem:[#allocation5 + $0x10] sm:$0xff] %v190
    %257 = vst [vmem:[#allocation5 + $0x18] sm:$0xff] %v231
    %258 = vst [vmem:[#allocation5 + $0x20] sm:$0xff] %v111
    %259 = vst [vmem:[#allocation5 + $0x28] sm:$0xff] %v152
    %260 = vst [vmem:[#allocation5 + $0x30] sm:$0xff] %v193
    %261 = vst [vmem:[#allocation5 + $0x38] sm:$0xff] %v234
    %262 = vst [vmem:[#allocation5 + $0x40] sm:$0xff] %v114
    %263 = vst [vmem:[#allocation5 + $0x48] sm:$0xff] %v155
    %264 = vst [vmem:[#allocation5 + $0x50] sm:$0xff] %v196
    %265 = vst [vmem:[#allocation5 + $0x58] sm:$0xff] %v237
    %266 = vst [vmem:[#allocation5 + $0x60] sm:$0xff] %v117
    %267 = vst [vmem:[#allocation5 + $0x68] sm:$0xff] %v158
    %268 = vst [vmem:[#allocation5 + $0x70] sm:$0xff] %v199
    %269 = vst [vmem:[#allocation5 + $0x78] sm:$0xff] %v240
    %270 = vst [vmem:[#allocation5 + $0x80] sm:$0xff] %v120
    %271 = vst [vmem:[#allocation5 + $0x88] sm:$0xff] %v161
    %272 = vst [vmem:[#allocation5 + $0x90] sm:$0xff] %v202
    %273 = vst [vmem:[#allocation5 + $0x98] sm:$0xff] %v243
    %274 = vst [vmem:[#allocation5 + $0xa0] sm:$0xff] %v123
    %275 = vst [vmem:[#allocation5 + $0xa8] sm:$0xff] %v164
    %276 = vst [vmem:[#allocation5 + $0xb0] sm:$0xff] %v205
    %277 = vst [vmem:[#allocation5 + $0xb8] sm:$0xff] %v246
    %278 = vst [vmem:[#allocation5 + $0xc0] sm:$0xff] %v126
    %279 = vst [vmem:[#allocation5 + $0xc8] sm:$0xff] %v167
    %280 = vst [vmem:[#allocation5 + $0xd0] sm:$0xff] %v208
    %281 = vst [vmem:[#allocation5 + $0xd8] sm:$0xff] %v249
    %282 = vst [vmem:[#allocation5 + $0xe0] sm:$0xff] %v129
    %283 = vst [vmem:[#allocation5 + $0xe8] sm:$0xff] %v170
    %284 = vst [vmem:[#allocation5 + $0xf0] sm:$0xff] %v211
    %285 = vst [vmem:[#allocation5 + $0xf8] sm:$0xff] %v252
    // Predicated region
    $region18: #{tpu_custom_call.1} parent=1 // pred_check
      _
    $region19: #{tpu_custom_call.1} parent=1 // pred_check_branch
      %287 = sbr.rel (0) target = $region21
    $region20: #{tpu_custom_call.1} parent=1 // pred_region
      %289 = vsyncadd [#allocation4], 0
      %s290 = sshll.u32 [#allocation5], 4
      %s291 = int_to_ptr.vmem [resolvable:$true] %s290
      %s292 = sshll.u32 %s3, 4
      %s293 = int_to_ptr.hbm [resolvable:$true] %s292
      %298 = dma.vmem_to_hbm [thread:$0]  %s291, 4096, %s293, [#allocation4], 512, 512, 32
    $region21: #{tpu_custom_call.1} parent=1 // pred_fallthru
      _
    // Predicated region
    $region22: #{tpu_custom_call.1} parent=1 // pred_check
      _
    $region23: #{tpu_custom_call.1} parent=1 // pred_check_branch
      %300 = sbr.rel (0) target = $region25
    $region24: #{tpu_custom_call.1} parent=1 // pred_region
      %302 = dma.done [#allocation4], 4096
    $region25: #{tpu_custom_call.1} parent=1 // pred_fallthru
      _
    %303 = vsyncpa [#allocation3], 1
    %304 = vsyncpa [#allocation4], 1

</llo_original>
